<compile_context>
chip_gen: v5e
topology: v5e:2x2
jax: 0.10.0
libtpu: 0.0.40
codegen_flags: <defaults>
</compile_context>

<pallas_src>
import functools

import numpy as np

import jax
import jax.numpy as jnp
from jax.experimental import pallas as pl
from jax.experimental.pallas import tpu as pltpu


NODE_TYPE_NUM = 26          # fixed in the PyTorch module
COL_FEAT = 8                # per-column raw feature width (fixed in the module)


# ----------------------------------------------------------------------------
# Kernel
# ----------------------------------------------------------------------------
def _feature_encoder_kernel(x_ref, w_ref, b_ref, out_ref, *,
                            d_type, d_col, table_num, group):
    x = x_ref[...]                                         # [tile_n, F]

    # One fused matmul: node-type Linear + all per-column Linears.
    z = jnp.dot(x, w_ref[...], preferred_element_type=jnp.float32) + b_ref[...]
    h = jnp.maximum(z, 0.0)                                # [tile_n, d_type + G*T*d_col]

    # Slot-major max pooling: slot j holds column j of every table (or zeros).
    # G-1 elementwise maxima over T*d_col-wide slices -> pure VPU work, and
    # the accumulator is already table_enc in table order.
    tw = table_num * d_col
    acc = h[:, d_type:d_type + tw]
    for j in range(1, group):
        s = d_type + j * tw
        acc = jnp.maximum(acc, h[:, s:s + tw])

    # Lane-dense output slab: [node_type_enc | table_enc | zero pad to 128k].
    pieces = [h[:, :d_type], acc]
    pad = out_ref.shape[1] - (d_type + tw)
    if pad:
        pieces.append(jnp.zeros((h.shape[0], pad), jnp.float32))
    out_ref[...] = jnp.concatenate(pieces, axis=1).astype(out_ref.dtype)


# ----------------------------------------------------------------------------
# One-time parameter packing (hoisted off the forward path)
# ----------------------------------------------------------------------------
def pack_params(params, table_columns_number, *, dtype=jnp.float32):
    """Pack node-type + per-column weights into one fused (W_full, b_full).

    Column layout is slot-major: output columns
      [0:d_type]                                -> node_type Linear
      [d_type + (j*T + t)*d_col : +d_col]       -> column j of table t
    Tables with fewer than G columns get zero weight columns (max-neutral
    under ReLU).
    """
    table_cols = tuple(int(k) for k in table_columns_number)
    w_type = np.asarray(jax.device_get(params["w_type"]), np.float32)  # [26, d_type]
    b_type = np.asarray(jax.device_get(params["b_type"]), np.float32)  # [1, d_type]
    w_cols = np.asarray(jax.device_get(params["w_cols"]), np.float32)  # [C, 8, d_col]

    C, _, d_col = w_cols.shape
    d_type = w_type.shape[1]
    T = len(table_cols)
    G = max(table_cols)
    assert sum(table_cols) == C and min(table_cols) >= 1

    F = NODE_TYPE_NUM + 2 + T + C * COL_FEAT
    H = d_type + G * T * d_col
    col_base = NODE_TYPE_NUM + 2 + T

    w_full = np.zeros((F, H), np.float32)
    w_full[:NODE_TYPE_NUM, :d_type] = w_type
    c = 0
    for t, k in enumerate(table_cols):
        for j in range(k):
            r0 = col_base + COL_FEAT * c
            o0 = d_type + (j * T + t) * d_col
            w_full[r0:r0 + COL_FEAT, o0:o0 + d_col] = w_cols[c]
            c += 1

    b_full = np.zeros((1, H), np.float32)
    b_full[:, :d_type] = b_type          # per-column Linears have no bias

    return {
        "w_full": jnp.asarray(w_full, dtype),
        "b_full": jnp.asarray(b_full, dtype),
        "d_type": d_type,
        "d_col": d_col,
        "table_num": T,
        "group": G,
        "column_num": C,
        "feat_dim": F,
    }


# ----------------------------------------------------------------------------
# Tiling policy
# ----------------------------------------------------------------------------
def _choose_tile(n, requested):
    """Single-TC chips (v5e/v6e): one big tile.  Multi-TC (v7x): >= 2 steps per
    core so "parallel" keeps both cores fed with double-buffering.  The tile
    must divide n and be a multiple of 8 (or equal the full batch)."""
    try:
        d = jax.devices()[0]
        kind = str(getattr(d, "device_kind", "")).lower()
        cores = int(getattr(d, "num_cores", 2 if "v7" in kind else 1))
        cores = max(1, cores)
    except Exception:
        cores = 1
    min_steps = 2 * cores if cores > 1 else 1

    cap = min(requested, n)
    t = cap - cap % 8
    while t >= 8:
        if n % t == 0 and n // t >= min_steps:
            return t
        t -= 8
    return n        # one tile == full batch extent (legal BlockSpec)


# ----------------------------------------------------------------------------
# Forward wrapper
# ----------------------------------------------------------------------------
def feature_encoder_forward(node_features, packed, *, tile_n=4096):
    d_type = packed["d_type"]
    d_col = packed["d_col"]
    T = packed["table_num"]
    G = packed["group"]
    F = packed["feat_dim"]
    w_full = packed["w_full"]
    b_full = packed["b_full"]
    H = w_full.shape[1]

    N, Fin = node_features.shape
    assert Fin == F, f"expected feature dim {F}, got {Fin}"

    out_core = d_type + T * d_col
    out_pad = max(((out_core + 127) // 128) * 128, 128)   # lane-dense output

    tile = _choose_tile(N, tile_n)
    grid = (N // tile,)

    kernel = functools.partial(
        _feature_encoder_kernel,
        d_type=d_type, d_col=d_col, table_num=T, group=G)

    slab = pl.pallas_call(
        kernel,
        out_shape=jax.ShapeDtypeStruct((N, out_pad), jnp.float32),
        grid_spec=pltpu.PrefetchScalarGridSpec(
            num_scalar_prefetch=0,
            grid=grid,
            in_specs=[
                pl.BlockSpec((tile, F), lambda i: (i, 0)),    # x, natural width
                pl.BlockSpec((F, H), lambda i: (0, 0)),       # fused weights
                pl.BlockSpec((1, H), lambda i: (0, 0)),       # fused bias
            ],
            out_specs=pl.BlockSpec((tile, out_pad), lambda i: (i, 0)),
        ),
        compiler_params=pltpu.CompilerParams(
            dimension_semantics=("parallel",)),
    )(node_features, w_full, b_full)

    # Passthrough + final assembly in the wrapper (cheap fused XLA copies).
    node_type_enc = slab[:, :d_type]
    table_enc = slab[:, d_type:d_type + T * d_col]
    stats = node_features[:, NODE_TYPE_NUM:NODE_TYPE_NUM + 2]
    used = node_features[:, NODE_TYPE_NUM + 2:NODE_TYPE_NUM + 2 + T]
    return jnp.concatenate([node_type_enc, stats, used, table_enc], axis=1)


# ----------------------------------------------------------------------------
# Pure-JAX reference (mirrors the PyTorch forward)
# ----------------------------------------------------------------------------
def feature_encoder_reference(node_features, params, table_columns_number):
    table_cols = tuple(int(k) for k in table_columns_number)
    w_type, b_type, w_cols = params["w_type"], params["b_type"], params["w_cols"]
    C, _, d_col = w_cols.shape
    T = len(table_cols)
    n = node_features.shape[0]

    x_type = node_features[:, :NODE_TYPE_NUM]
    x_stats = node_features[:, NODE_TYPE_NUM:NODE_TYPE_NUM + 2]
    x_used = node_features[:, NODE_TYPE_NUM + 2:NODE_TYPE_NUM + 2 + T]
    x_cols = node_features[:, NODE_TYPE_NUM + 2 + T:].reshape(n, C, COL_FEAT)

    type_enc = jnp.maximum(x_type @ w_type + b_type, 0.0)
    col_enc = jnp.maximum(jnp.einsum('ncf,cfd->ncd', x_cols, w_cols), 0.0)

    pooled, off = [], 0
    for k in table_cols:
        pooled.append(col_enc[:, off:off + k, :].max(axis=1))
        off += k
    table_enc = jnp.concatenate(pooled, axis=1)
    return jnp.concatenate([type_enc, x_stats, x_used, table_enc], axis=1)


# ----------------------------------------------------------------------------
# Deterministic parameter init
# ----------------------------------------------------------------------------
def init_params(key, *, column_num, d_type, d_col):
    k1, k2, k3 = jax.random.split(key, 3)
    w_type = (jax.random.normal(k1, (NODE_TYPE_NUM, d_type), jnp.float32)
              / jnp.sqrt(jnp.float32(NODE_TYPE_NUM)))
    b_type = 0.1 * jax.random.normal(k2, (1, d_type), jnp.float32)
    w_cols = (jax.random.normal(k3, (column_num, COL_FEAT, d_col), jnp.float32)
              / jnp.sqrt(jnp.float32(COL_FEAT)))
    return {"w_type": w_type, "b_type": b_type, "w_cols": w_cols}


# ----------------------------------------------------------------------------
if __name__ == "__main__":
    key = jax.random.PRNGKey(0)
    k_x, k_p = jax.random.split(key)

    COLUMN_NUM = 6
    TABLE_NUM = 3
    TABLE_COLS = (2, 3, 1)          # columns per table, sums to COLUMN_NUM
    D_TYPE = 32                     # encoder_node_type_embedding_dim
    D_COL = 16                      # encoder_column_embedding_dim
    N = 256                         # number of plan nodes (batch)
    F = NODE_TYPE_NUM + 2 + TABLE_NUM + COLUMN_NUM * COL_FEAT   # 79

    x = jax.random.normal(k_x, (N, F), jnp.float32)
    params = init_params(k_p, column_num=COLUMN_NUM, d_type=D_TYPE, d_col=D_COL)

    # Packing is done ONCE, off the forward path.
    packed = pack_params(params, TABLE_COLS)

    out = feature_encoder_forward(x, packed)
    jax.block_until_ready(out)

    ref = feature_encoder_reference(x, params, TABLE_COLS)
    out_dim = D_TYPE + 2 + TABLE_NUM + TABLE_NUM * D_COL        # 85
    assert out.shape == (N, out_dim), out.shape
    assert jnp.allclose(out, ref, atol=1e-3, rtol=1e-3)

    print("KERNEL_OK")
</pallas_src>

<mosaic_0001>
module attributes {stable_mosaic.version = 11 : i64} {
  func.func @_feature_encoder_kernel(%arg0: i32, %arg1: memref<256x79xf32, #tpu.memory_space<vmem>>, %arg2: memref<79x176xf32, #tpu.memory_space<vmem>>, %arg3: memref<1x176xf32, #tpu.memory_space<vmem>>, %arg4: memref<256x128xf32, #tpu.memory_space<vmem>>) attributes {dimension_semantics = [#tpu.dimension_semantics<parallel>], iteration_bounds = array<i64: 1>, scalar_prefetch = 0 : i64, scratch_operands = 0 : i64, tpu.core_type = #tpu.core_type<tc>, window_params = [{transform_indices = @transform_0, window_bounds = array<i64: 256, 79>}, {pipeline_mode = #tpu.pipeline_mode<synchronous>, transform_indices = @transform_1, window_bounds = array<i64: 79, 176>}, {pipeline_mode = #tpu.pipeline_mode<synchronous>, transform_indices = @transform_2, window_bounds = array<i64: 1, 176>}, {transform_indices = @transform_3, window_bounds = array<i64: 256, 128>}]} {
    %c0 = arith.constant 0 : index
    %c0_0 = arith.constant 0 : index
    %0 = vector.load %arg1[%c0, %c0_0] : memref<256x79xf32, #tpu.memory_space<vmem>>, vector<256x79xf32>
    %c0_1 = arith.constant 0 : index
    %c0_2 = arith.constant 0 : index
    %1 = vector.load %arg2[%c0_1, %c0_2] : memref<79x176xf32, #tpu.memory_space<vmem>>, vector<79x176xf32>
    %cst = arith.constant dense<0.000000e+00> : vector<256x176xf32>
    %2 = tpu.matmul %0, %1, %cst {dimension_numbers = #tpu.dot_dimension_numbers<[1], [0], [0], [1], [0, 0, 1, 1], [], []>} : vector<256x79xf32>, vector<79x176xf32>, vector<256x176xf32> -> vector<256x176xf32>
    %c0_3 = arith.constant 0 : index
    %c0_4 = arith.constant 0 : index
    %3 = vector.load %arg3[%c0_3, %c0_4] : memref<1x176xf32, #tpu.memory_space<vmem>>, vector<1x176xf32>
    %4 = vector.broadcast %3 : vector<1x176xf32> to vector<256x176xf32>
    %5 = arith.addf %2, %4 : vector<256x176xf32>
    %cst_5 = arith.constant 0.000000e+00 : f32
    %6 = vector.broadcast %cst_5 : f32 to vector<256x176xf32>
    %7 = arith.maximumf %5, %6 : vector<256x176xf32>
    %8 = vector.extract_strided_slice %7 {offsets = [0, 32], sizes = [256, 48], strides = [1, 1]} : vector<256x176xf32> to vector<256x48xf32>
    %9 = vector.extract_strided_slice %7 {offsets = [0, 80], sizes = [256, 48], strides = [1, 1]} : vector<256x176xf32> to vector<256x48xf32>
    %10 = arith.maximumf %8, %9 : vector<256x48xf32>
    %11 = vector.extract_strided_slice %7 {offsets = [0, 128], sizes = [256, 48], strides = [1, 1]} : vector<256x176xf32> to vector<256x48xf32>
    %12 = arith.maximumf %10, %11 : vector<256x48xf32>
    %13 = vector.extract_strided_slice %7 {offsets = [0, 0], sizes = [256, 32], strides = [1, 1]} : vector<256x176xf32> to vector<256x32xf32>
    %cst_6 = arith.constant 0.000000e+00 : f32
    %14 = vector.broadcast %cst_6 : f32 to vector<256x48xf32>
    %15 = tpu.concatenate %13, %12, %14 in 1 : vector<256x32xf32>, vector<256x48xf32>, vector<256x48xf32> -> vector<256x128xf32>
    %c0_7 = arith.constant 0 : index
    %c0_8 = arith.constant 0 : index
    %16 = vector.load %arg4[%c0_7, %c0_8] : memref<256x128xf32, #tpu.memory_space<vmem>>, vector<256x128xf32>
    tpu.vector_store %arg4[%c0_7, %c0_8], %15 {strides = array<i32>} : memref<256x128xf32, #tpu.memory_space<vmem>>, vector<256x128xf32>,
    return
  }
  func.func @transform_0(%arg0: i32) -> (i32, i32) {
    %c0_i32 = arith.constant 0 : i32
    %c0_i32_0 = arith.constant 0 : i32
    return %arg0, %c0_i32 : i32, i32
  }
  func.func @transform_1(%arg0: i32) -> (i32, i32) {
    %c0_i32 = arith.constant 0 : i32
    %c0_i32_0 = arith.constant 0 : i32
    %c0_i32_1 = arith.constant 0 : i32
    return %c0_i32, %c0_i32_0 : i32, i32
  }
  func.func @transform_2(%arg0: i32) -> (i32, i32) {
    %c0_i32 = arith.constant 0 : i32
    %c0_i32_0 = arith.constant 0 : i32
    %c0_i32_1 = arith.constant 0 : i32
    return %c0_i32, %c0_i32_0 : i32, i32
  }
  func.func @transform_3(%arg0: i32) -> (i32, i32) {
    %c0_i32 = arith.constant 0 : i32
    %c0_i32_0 = arith.constant 0 : i32
    return %arg0, %c0_i32 : i32, i32
  }
}

</mosaic_0001>

<llo_original>
// kernel: tpu_custom_call.1
$region0: #{tpu_custom_call.1}
  #allocation0 [shape = 'u32[]', space=smem, size = 0x4, offset = 0x4, fixed_abs, tag = 'smem constant byte address 0x4 - core index']
  #allocation1 [shape = 'u32[72,128]{1,0:T(1,128)}', space=vmem, size = 0x9000, scoped, tag = 'internal scratch']
  %s0 = inlined_call_operand.vmem [shape: f32[256,79], index: 0, kind: input, shape index: {}]
  %s1 = inlined_call_operand.vmem [shape: f32[79,176], index: 1, kind: input, shape index: {}]
  %s2 = inlined_call_operand.vmem [shape: f32[1,176], index: 2, kind: input, shape index: {}]
  %s3 = inlined_call_operand.hbm [shape: f32[256,128], index: 3, kind: output, shape index: {}]
  %s4 = sld [smem:[#allocation0]]
  $region22: #{tpu_custom_call.1} parent=0
    _
  %s6 = ssub.s32 1, %s4
  %s7 = scalar_select 0, %s6, %s4
  $region1: #{tpu_custom_call.1} parent=0
    #allocation2 [shape = 'u8[131072]{0}', space=vmem, size = 0x20000, scoped, tag = 'output window, operand 0, single buffered']
    #allocation3 [shape = 's32[1]{0}', space=sflag, size = 0x4, scoped, tag = 'scoped memory for tpu_custom_call.1']
    %8 = vsyncpa [#allocation3], 0
    // Predicated region
    $region2: #{tpu_custom_call.1} parent=1 // pred_check
      _
    $region3: #{tpu_custom_call.1} parent=1 // pred_check_branch
      %10 = sbr.rel (0) target = $region5
    $region4: #{tpu_custom_call.1} parent=1 // pred_region
      _
    $region5: #{tpu_custom_call.1} parent=1 // pred_fallthru
      _
    // Predicated region
    $region6: #{tpu_custom_call.1} parent=1 // pred_check
      _
    $region7: #{tpu_custom_call.1} parent=1 // pred_check_branch
      %12 = sbr.rel (0) target = $region9
    $region8: #{tpu_custom_call.1} parent=1 // pred_region
      _
    $region9: #{tpu_custom_call.1} parent=1 // pred_fallthru
      _
    // Predicated region
    $region10: #{tpu_custom_call.1} parent=1 // pred_check
      _
    $region11: #{tpu_custom_call.1} parent=1 // pred_check_branch
      %14 = sbr.rel (0) target = $region13
    $region12: #{tpu_custom_call.1} parent=1 // pred_region
      _
    $region13: #{tpu_custom_call.1} parent=1 // pred_fallthru
      _
    %v15 = vld [vmem:[%s0] sm:$0xff]
    %v16 = vld [vmem:[%s0 + $0x8] sm:$0xff]
    %v17 = vld [vmem:[%s0 + $0x10] sm:$0xff]
    %v18 = vld [vmem:[%s0 + $0x18] sm:$0xff]
    %v19 = vld [vmem:[%s0 + $0x20] sm:$0xff]
    %v20 = vld [vmem:[%s0 + $0x28] sm:$0xff]
    %v21 = vld [vmem:[%s0 + $0x30] sm:$0xff]
    %v22 = vld [vmem:[%s0 + $0x38] sm:$0xff]
    %v23 = vld [vmem:[%s0 + $0x40] sm:$0xff]
    %v24 = vld [vmem:[%s0 + $0x48] sm:$0xff]
    %v25 = vld [vmem:[%s0 + $0x50] sm:$0xff]
    %v26 = vld [vmem:[%s0 + $0x58] sm:$0xff]
    %v27 = vld [vmem:[%s0 + $0x60] sm:$0xff]
    %v28 = vld [vmem:[%s0 + $0x68] sm:$0xff]
    %v29 = vld [vmem:[%s0 + $0x70] sm:$0xff]
    %v30 = vld [vmem:[%s0 + $0x78] sm:$0xff]
    %v31 = vld [vmem:[%s0 + $0x80] sm:$0xff]
    %v32 = vld [vmem:[%s0 + $0x88] sm:$0xff]
    %v33 = vld [vmem:[%s0 + $0x90] sm:$0xff]
    %v34 = vld [vmem:[%s0 + $0x98] sm:$0xff]
    %v35 = vld [vmem:[%s0 + $0xa0] sm:$0xff]
    %v36 = vld [vmem:[%s0 + $0xa8] sm:$0xff]
    %v37 = vld [vmem:[%s0 + $0xb0] sm:$0xff]
    %v38 = vld [vmem:[%s0 + $0xb8] sm:$0xff]
    %v39 = vld [vmem:[%s0 + $0xc0] sm:$0xff]
    %v40 = vld [vmem:[%s0 + $0xc8] sm:$0xff]
    %v41 = vld [vmem:[%s0 + $0xd0] sm:$0xff]
    %v42 = vld [vmem:[%s0 + $0xd8] sm:$0xff]
    %v43 = vld [vmem:[%s0 + $0xe0] sm:$0xff]
    %v44 = vld [vmem:[%s0 + $0xe8] sm:$0xff]
    %v45 = vld [vmem:[%s0 + $0xf0] sm:$0xff]
    %v46 = vld [vmem:[%s0 + $0xf8] sm:$0xff]
    %v47 = vld [vmem:[%s1] sm:$0xff]
    %v48 = vld [vmem:[%s1 + $0x8] sm:$0xff]
    %v49 = vld [vmem:[%s1 + $0x10] sm:$0xff]
    %v50 = vld [vmem:[%s1 + $0x18] sm:$0xff]
    %v51 = vld [vmem:[%s1 + $0x20] sm:$0xff]
    %v52 = vld [vmem:[%s1 + $0x28] sm:$0xff]
    %v53 = vld [vmem:[%s1 + $0x30] sm:$0xff]
    %v54 = vld [vmem:[%s1 + $0x38] sm:$0xff]
    %v55 = vld [vmem:[%s1 + $0x40] sm:$0xff]
    %v56 = vld [vmem:[%s1 + $0x48] sm:$0xff]
    %v57 = vld [vmem:[%s1 + $0x50] sm:$0xff]
    %v58 = vld [vmem:[%s1 + $0x58] sm:$0xff]
    %v59 = vld [vmem:[%s1 + $0x60] sm:$0xff]
    %v60 = vld [vmem:[%s1 + $0x68] sm:$0xff]
    %v61 = vld [vmem:[%s1 + $0x70] sm:$0xff]
    %v62 = vld [vmem:[%s1 + $0x78] sm:$0xff]
    %v63 = vld [vmem:[%s1 + $0x80] sm:$0xff]
    %v64 = vld [vmem:[%s1 + $0x88] sm:$0xff]
    %v65 = vld [vmem:[%s1 + $0x90] sm:$0x7f]
    %v66 = vld [vmem:[%s1 + $0x98] sm:$0x7f]
    %v67 = vld [vmem:[%s2] sm:$0x3]
    %v69 = vperm.slane %v67, 0
    %v70 = vperm.slane %v67, 1
    %vm73 = vcmask 646144
    %v75 = vsel %vm73, %v15, 0
    %v78 = vsel %vm73, %v16, 0
    %v81 = vsel %vm73, %v17, 0
    %v84 = vsel %vm73, %v18, 0
    %v87 = vsel %vm73, %v19, 0
    %v90 = vsel %vm73, %v20, 0
    %v93 = vsel %vm73, %v21, 0
    %v96 = vsel %vm73, %v22, 0
    %v99 = vsel %vm73, %v23, 0
    %v102 = vsel %vm73, %v24, 0
    %v105 = vsel %vm73, %v25, 0
    %v108 = vsel %vm73, %v26, 0
    %v111 = vsel %vm73, %v27, 0
    %v114 = vsel %vm73, %v28, 0
    %v117 = vsel %vm73, %v29, 0
    %v120 = vsel %vm73, %v30, 0
    %v123 = vsel %vm73, %v31, 0
    %v126 = vsel %vm73, %v32, 0
    %v129 = vsel %vm73, %v33, 0
    %v132 = vsel %vm73, %v34, 0
    %v135 = vsel %vm73, %v35, 0
    %v138 = vsel %vm73, %v36, 0
    %v141 = vsel %vm73, %v37, 0
    %v144 = vsel %vm73, %v38, 0
    %v147 = vsel %vm73, %v39, 0
    %v150 = vsel %vm73, %v40, 0
    %v153 = vsel %vm73, %v41, 0
    %v156 = vsel %vm73, %v42, 0
    %v159 = vsel %vm73, %v43, 0
    %v162 = vsel %vm73, %v44, 0
    %v165 = vsel %vm73, %v45, 0
    %v168 = vsel %vm73, %v46, 0
    %vm170 = vcmask 1046528
    %v172 = vsel %vm170, %v65, 0
    %v175 = vsel %vm170, %v66, 0
    %177 = vmatpush.msra.mxu0 0.0
    %178 = vmatpush.msra.mxu0 0.0
    %179 = vmatpush.msra.mxu0 0.0
    %180 = vmatpush.msra.mxu0 0.0
    %181 = vmatpush.msra.mxu0 0.0
    %182 = vmatpush.msra.mxu0 0.0
    %183 = vmatpush.msra.mxu0 %v172
    %184 = vmatpush.msra.mxu0 %v63
    %185 = vmatpush.msra.mxu0 %v61
    %186 = vmatpush.msra.mxu0 %v59
    %187 = vmatpush.msra.mxu0 %v57
    %188 = vmatpush.msra.mxu0 %v55
    %189 = vmatpush.msra.mxu0 %v53
    %190 = vmatpush.msra.mxu0 %v51
    %191 = vmatpush.msra.mxu0 %v49
    %192 = vmatpush.msra.mxu0 %v47
    %193 = vmatmul.f32.gmra.mxu0 %v75
    %v194 = vpop.f32.mrf.mxu0
    %v195 = vadd.f32 %v69, %v194
    %196 = vmatmul.f32.gmra.mxu0 %v78
    %v197 = vpop.f32.mrf.mxu0
    %v198 = vadd.f32 %v69, %v197
    %199 = vmatmul.f32.gmra.mxu0 %v81
    %v200 = vpop.f32.mrf.mxu0
    %v201 = vadd.f32 %v69, %v200
    %202 = vmatmul.f32.gmra.mxu0 %v84
    %v203 = vpop.f32.mrf.mxu0
    %v204 = vadd.f32 %v69, %v203
    %205 = vmatmul.f32.gmra.mxu0 %v87
    %v206 = vpop.f32.mrf.mxu0
    %v207 = vadd.f32 %v69, %v206
    %208 = vmatmul.f32.gmra.mxu0 %v90
    %v209 = vpop.f32.mrf.mxu0
    %v210 = vadd.f32 %v69, %v209
    %211 = vmatmul.f32.gmra.mxu0 %v93
    %v212 = vpop.f32.mrf.mxu0
    %v213 = vadd.f32 %v69, %v212
    %214 = vmatmul.f32.gmra.mxu0 %v96
    %v215 = vpop.f32.mrf.mxu0
    %v216 = vadd.f32 %v69, %v215
    %217 = vmatmul.f32.gmra.mxu0 %v99
    %v218 = vpop.f32.mrf.mxu0
    %v219 = vadd.f32 %v69, %v218
    %220 = vmatmul.f32.gmra.mxu0 %v102
    %v221 = vpop.f32.mrf.mxu0
    %v222 = vadd.f32 %v69, %v221
    %223 = vmatmul.f32.gmra.mxu0 %v105
    %v224 = vpop.f32.mrf.mxu0
    %v225 = vadd.f32 %v69, %v224
    %226 = vmatmul.f32.gmra.mxu0 %v108
    %v227 = vpop.f32.mrf.mxu0
    %v228 = vadd.f32 %v69, %v227
    %229 = vmatmul.f32.gmra.mxu0 %v111
    %v230 = vpop.f32.mrf.mxu0
    %v231 = vadd.f32 %v69, %v230
    %232 = vmatmul.f32.gmra.mxu0 %v114
    %v233 = vpop.f32.mrf.mxu0
    %v234 = vadd.f32 %v69, %v233
    %235 = vmatmul.f32.gmra.mxu0 %v117
    %v236 = vpop.f32.mrf.mxu0
    %v237 = vadd.f32 %v69, %v236
    %238 = vmatmul.f32.gmra.mxu0 %v120
    %v239 = vpop.f32.mrf.mxu0
    %v240 = vadd.f32 %v69, %v239
    %241 = vmatmul.f32.gmra.mxu0 %v123
    %v242 = vpop.f32.mrf.mxu0
    %v243 = vadd.f32 %v69, %v242
    %244 = vmatmul.f32.gmra.mxu0 %v126
    %v245 = vpop.f32.mrf.mxu0
    %v246 = vadd.f32 %v69, %v245
    %247 = vmatmul.f32.gmra.mxu0 %v129
    %v248 = vpop.f32.mrf.mxu0
    %v249 = vadd.f32 %v69, %v248
    %250 = vmatmul.f32.gmra.mxu0 %v132
    %v251 = vpop.f32.mrf.mxu0
    %v252 = vadd.f32 %v69, %v251
    %253 = vmatmul.f32.gmra.mxu0 %v135
    %v254 = vpop.f32.mrf.mxu0
    %v255 = vadd.f32 %v69, %v254
    %256 = vmatmul.f32.gmra.mxu0 %v138
    %v257 = vpop.f32.mrf.mxu0
    %v258 = vadd.f32 %v69, %v257
    %259 = vmatmul.f32.gmra.mxu0 %v141
    %v260 = vpop.f32.mrf.mxu0
    %v261 = vadd.f32 %v69, %v260
    %262 = vmatmul.f32.gmra.mxu0 %v144
    %v263 = vpop.f32.mrf.mxu0
    %v264 = vadd.f32 %v69, %v263
    %265 = vmatmul.f32.gmra.mxu0 %v147
    %v266 = vpop.f32.mrf.mxu0
    %v267 = vadd.f32 %v69, %v266
    %268 = vmatmul.f32.gmra.mxu0 %v150
    %v269 = vpop.f32.mrf.mxu0
    %v270 = vadd.f32 %v69, %v269
    %271 = vmatmul.f32.gmra.mxu0 %v153
    %v272 = vpop.f32.mrf.mxu0
    %v273 = vadd.f32 %v69, %v272
    %274 = vmatmul.f32.gmra.mxu0 %v156
    %v275 = vpop.f32.mrf.mxu0
    %v276 = vadd.f32 %v69, %v275
    %277 = vmatmul.f32.gmra.mxu0 %v159
    %v278 = vpop.f32.mrf.mxu0
    %v279 = vadd.f32 %v69, %v278
    %280 = vmatmul.f32.gmra.mxu0 %v162
    %v281 = vpop.f32.mrf.mxu0
    %v282 = vadd.f32 %v69, %v281
    %283 = vmatmul.f32.gmra.mxu0 %v165
    %v284 = vpop.f32.mrf.mxu0
    %v285 = vadd.f32 %v69, %v284
    %286 = vmatmul.f32.gmra.mxu0 %v168
    %v287 = vpop.f32.mrf.mxu0
    %v288 = vadd.f32 %v69, %v287
    %289 = vdwg.mxu0
    %290 = vmatpush.msra.mxu0 0.0
    %291 = vmatpush.msra.mxu0 0.0
    %292 = vmatpush.msra.mxu0 0.0
    %293 = vmatpush.msra.mxu0 0.0
    %294 = vmatpush.msra.mxu0 0.0
    %295 = vmatpush.msra.mxu0 0.0
    %296 = vmatpush.msra.mxu0 %v175
    %297 = vmatpush.msra.mxu0 %v64
    %298 = vmatpush.msra.mxu0 %v62
    %299 = vmatpush.msra.mxu0 %v60
    %300 = vmatpush.msra.mxu0 %v58
    %301 = vmatpush.msra.mxu0 %v56
    %302 = vmatpush.msra.mxu0 %v54
    %303 = vmatpush.msra.mxu0 %v52
    %304 = vmatpush.msra.mxu0 %v50
    %305 = vmatpush.msra.mxu0 %v48
    %306 = vmatmul.f32.gmra.mxu0 %v75
    %v307 = vpop.f32.mrf.mxu0
    %v308 = vadd.f32 %v70, %v307
    %309 = vmatmul.f32.gmra.mxu0 %v78
    %v310 = vpop.f32.mrf.mxu0
    %v311 = vadd.f32 %v70, %v310
    %312 = vmatmul.f32.gmra.mxu0 %v81
    %v313 = vpop.f32.mrf.mxu0
    %v314 = vadd.f32 %v70, %v313
    %315 = vmatmul.f32.gmra.mxu0 %v84
    %v316 = vpop.f32.mrf.mxu0
    %v317 = vadd.f32 %v70, %v316
    %318 = vmatmul.f32.gmra.mxu0 %v87
    %v319 = vpop.f32.mrf.mxu0
    %v320 = vadd.f32 %v70, %v319
    %321 = vmatmul.f32.gmra.mxu0 %v90
    %v322 = vpop.f32.mrf.mxu0
    %v323 = vadd.f32 %v70, %v322
    %324 = vmatmul.f32.gmra.mxu0 %v93
    %v325 = vpop.f32.mrf.mxu0
    %v326 = vadd.f32 %v70, %v325
    %327 = vmatmul.f32.gmra.mxu0 %v96
    %v328 = vpop.f32.mrf.mxu0
    %v329 = vadd.f32 %v70, %v328
    %330 = vmatmul.f32.gmra.mxu0 %v99
    %v331 = vpop.f32.mrf.mxu0
    %v332 = vadd.f32 %v70, %v331
    %333 = vmatmul.f32.gmra.mxu0 %v102
    %v334 = vpop.f32.mrf.mxu0
    %v335 = vadd.f32 %v70, %v334
    %336 = vmatmul.f32.gmra.mxu0 %v105
    %v337 = vpop.f32.mrf.mxu0
    %v338 = vadd.f32 %v70, %v337
    %339 = vmatmul.f32.gmra.mxu0 %v108
    %v340 = vpop.f32.mrf.mxu0
    %v341 = vadd.f32 %v70, %v340
    %342 = vmatmul.f32.gmra.mxu0 %v111
    %v343 = vpop.f32.mrf.mxu0
    %v344 = vadd.f32 %v70, %v343
    %345 = vmatmul.f32.gmra.mxu0 %v114
    %v346 = vpop.f32.mrf.mxu0
    %v347 = vadd.f32 %v70, %v346
    %348 = vmatmul.f32.gmra.mxu0 %v117
    %v349 = vpop.f32.mrf.mxu0
    %v350 = vadd.f32 %v70, %v349
    %351 = vmatmul.f32.gmra.mxu0 %v120
    %v352 = vpop.f32.mrf.mxu0
    %v353 = vadd.f32 %v70, %v352
    %354 = vmatmul.f32.gmra.mxu0 %v123
    %v355 = vpop.f32.mrf.mxu0
    %v356 = vadd.f32 %v70, %v355
    %357 = vmatmul.f32.gmra.mxu0 %v126
    %v358 = vpop.f32.mrf.mxu0
    %v359 = vadd.f32 %v70, %v358
    %360 = vmatmul.f32.gmra.mxu0 %v129
    %v361 = vpop.f32.mrf.mxu0
    %v362 = vadd.f32 %v70, %v361
    %363 = vmatmul.f32.gmra.mxu0 %v132
    %v364 = vpop.f32.mrf.mxu0
    %v365 = vadd.f32 %v70, %v364
    %366 = vmatmul.f32.gmra.mxu0 %v135
    %v367 = vpop.f32.mrf.mxu0
    %v368 = vadd.f32 %v70, %v367
    %369 = vmatmul.f32.gmra.mxu0 %v138
    %v370 = vpop.f32.mrf.mxu0
    %v371 = vadd.f32 %v70, %v370
    %372 = vmatmul.f32.gmra.mxu0 %v141
    %v373 = vpop.f32.mrf.mxu0
    %v374 = vadd.f32 %v70, %v373
    %375 = vmatmul.f32.gmra.mxu0 %v144
    %v376 = vpop.f32.mrf.mxu0
    %v377 = vadd.f32 %v70, %v376
    %378 = vmatmul.f32.gmra.mxu0 %v147
    %v379 = vpop.f32.mrf.mxu0
    %v380 = vadd.f32 %v70, %v379
    %381 = vmatmul.f32.gmra.mxu0 %v150
    %v382 = vpop.f32.mrf.mxu0
    %v383 = vadd.f32 %v70, %v382
    %384 = vmatmul.f32.gmra.mxu0 %v153
    %v385 = vpop.f32.mrf.mxu0
    %v386 = vadd.f32 %v70, %v385
    %387 = vmatmul.f32.gmra.mxu0 %v156
    %v388 = vpop.f32.mrf.mxu0
    %v389 = vadd.f32 %v70, %v388
    %390 = vmatmul.f32.gmra.mxu0 %v159
    %v391 = vpop.f32.mrf.mxu0
    %v392 = vadd.f32 %v70, %v391
    %393 = vmatmul.f32.gmra.mxu0 %v162
    %v394 = vpop.f32.mrf.mxu0
    %v395 = vadd.f32 %v70, %v394
    %396 = vmatmul.f32.gmra.mxu0 %v165
    %v397 = vpop.f32.mrf.mxu0
    %v398 = vadd.f32 %v70, %v397
    %399 = vmatmul.f32.gmra.mxu0 %v168
    %v400 = vpop.f32.mrf.mxu0
    %v401 = vadd.f32 %v70, %v400
    %402 = vdwg.mxu0
    %v403 = vmax.f32 %v195, 0.0
    %v404 = vmax.f32 %v308, 0.0
    %v405 = vmax.f32 %v198, 0.0
    %v406 = vmax.f32 %v311, 0.0
    %v407 = vmax.f32 %v201, 0.0
    %v408 = vmax.f32 %v314, 0.0
    %v409 = vmax.f32 %v204, 0.0
    %v410 = vmax.f32 %v317, 0.0
    %v411 = vmax.f32 %v207, 0.0
    %v412 = vmax.f32 %v320, 0.0
    %v413 = vmax.f32 %v210, 0.0
    %v414 = vmax.f32 %v323, 0.0
    %v415 = vmax.f32 %v213, 0.0
    %v416 = vmax.f32 %v326, 0.0
    %v417 = vmax.f32 %v216, 0.0
    %v418 = vmax.f32 %v329, 0.0
    %v419 = vmax.f32 %v219, 0.0
    %v420 = vmax.f32 %v332, 0.0
    %v421 = vmax.f32 %v222, 0.0
    %v422 = vmax.f32 %v335, 0.0
    %v423 = vmax.f32 %v225, 0.0
    %v424 = vmax.f32 %v338, 0.0
    %v425 = vmax.f32 %v228, 0.0
    %v426 = vmax.f32 %v341, 0.0
    %v427 = vmax.f32 %v231, 0.0
    %v428 = vmax.f32 %v344, 0.0
    %v429 = vmax.f32 %v234, 0.0
    %v430 = vmax.f32 %v347, 0.0
    %v431 = vmax.f32 %v237, 0.0
    %v432 = vmax.f32 %v350, 0.0
    %v433 = vmax.f32 %v240, 0.0
    %v434 = vmax.f32 %v353, 0.0
    %v435 = vmax.f32 %v243, 0.0
    %v436 = vmax.f32 %v356, 0.0
    %v437 = vmax.f32 %v246, 0.0
    %v438 = vmax.f32 %v359, 0.0
    %v439 = vmax.f32 %v249, 0.0
    %v440 = vmax.f32 %v362, 0.0
    %v441 = vmax.f32 %v252, 0.0
    %v442 = vmax.f32 %v365, 0.0
    %v443 = vmax.f32 %v255, 0.0
    %v444 = vmax.f32 %v368, 0.0
    %v445 = vmax.f32 %v258, 0.0
    %v446 = vmax.f32 %v371, 0.0
    %v447 = vmax.f32 %v261, 0.0
    %v448 = vmax.f32 %v374, 0.0
    %v449 = vmax.f32 %v264, 0.0
    %v450 = vmax.f32 %v377, 0.0
    %v451 = vmax.f32 %v267, 0.0
    %v452 = vmax.f32 %v380, 0.0
    %v453 = vmax.f32 %v270, 0.0
    %v454 = vmax.f32 %v383, 0.0
    %v455 = vmax.f32 %v273, 0.0
    %v456 = vmax.f32 %v386, 0.0
    %v457 = vmax.f32 %v276, 0.0
    %v458 = vmax.f32 %v389, 0.0
    %v459 = vmax.f32 %v279, 0.0
    %v460 = vmax.f32 %v392, 0.0
    %v461 = vmax.f32 %v282, 0.0
    %v462 = vmax.f32 %v395, 0.0
    %v463 = vmax.f32 %v285, 0.0
    %v464 = vmax.f32 %v398, 0.0
    %v465 = vmax.f32 %v288, 0.0
    %v466 = vmax.f32 %v401, 0.0
    %499 = vrot.lane.b32.xlu0 %v403, 80
    %v500 = vpop.permute.xlu0 %499
    %501 = vrot.lane.b32.xlu0 %v405, 80
    %v502 = vpop.permute.xlu0 %501
    %503 = vrot.lane.b32.xlu0 %v407, 80
    %v504 = vpop.permute.xlu0 %503
    %505 = vrot.lane.b32.xlu0 %v409, 80
    %v506 = vpop.permute.xlu0 %505
    %507 = vrot.lane.b32.xlu0 %v411, 80
    %v508 = vpop.permute.xlu0 %507
    %509 = vrot.lane.b32.xlu0 %v413, 80
    %v510 = vpop.permute.xlu0 %509
    %511 = vrot.lane.b32.xlu0 %v415, 80
    %v512 = vpop.permute.xlu0 %511
    %513 = vrot.lane.b32.xlu0 %v417, 80
    %v514 = vpop.permute.xlu0 %513
    %515 = vrot.lane.b32.xlu0 %v419, 80
    %v516 = vpop.permute.xlu0 %515
    %517 = vrot.lane.b32.xlu0 %v421, 80
    %v518 = vpop.permute.xlu0 %517
    %519 = vrot.lane.b32.xlu0 %v423, 80
    %v520 = vpop.permute.xlu0 %519
    %521 = vrot.lane.b32.xlu0 %v425, 80
    %v522 = vpop.permute.xlu0 %521
    %523 = vrot.lane.b32.xlu0 %v427, 80
    %v524 = vpop.permute.xlu0 %523
    %525 = vrot.lane.b32.xlu0 %v429, 80
    %v526 = vpop.permute.xlu0 %525
    %527 = vrot.lane.b32.xlu0 %v431, 80
    %v528 = vpop.permute.xlu0 %527
    %529 = vrot.lane.b32.xlu0 %v433, 80
    %v530 = vpop.permute.xlu0 %529
    %531 = vrot.lane.b32.xlu0 %v435, 80
    %v532 = vpop.permute.xlu0 %531
    %533 = vrot.lane.b32.xlu0 %v437, 80
    %v534 = vpop.permute.xlu0 %533
    %535 = vrot.lane.b32.xlu0 %v439, 80
    %v536 = vpop.permute.xlu0 %535
    %537 = vrot.lane.b32.xlu0 %v441, 80
    %v538 = vpop.permute.xlu0 %537
    %539 = vrot.lane.b32.xlu0 %v443, 80
    %v540 = vpop.permute.xlu0 %539
    %541 = vrot.lane.b32.xlu0 %v445, 80
    %v542 = vpop.permute.xlu0 %541
    %543 = vrot.lane.b32.xlu0 %v447, 80
    %v544 = vpop.permute.xlu0 %543
    %545 = vrot.lane.b32.xlu0 %v449, 80
    %v546 = vpop.permute.xlu0 %545
    %547 = vrot.lane.b32.xlu0 %v451, 80
    %v548 = vpop.permute.xlu0 %547
    %549 = vrot.lane.b32.xlu0 %v453, 80
    %v550 = vpop.permute.xlu0 %549
    %551 = vrot.lane.b32.xlu0 %v455, 80
    %v552 = vpop.permute.xlu0 %551
    %553 = vrot.lane.b32.xlu0 %v457, 80
    %v554 = vpop.permute.xlu0 %553
    %555 = vrot.lane.b32.xlu0 %v459, 80
    %v556 = vpop.permute.xlu0 %555
    %557 = vrot.lane.b32.xlu0 %v461, 80
    %v558 = vpop.permute.xlu0 %557
    %559 = vrot.lane.b32.xlu0 %v463, 80
    %v560 = vpop.permute.xlu0 %559
    %561 = vrot.lane.b32.xlu0 %v465, 80
    %v562 = vpop.permute.xlu0 %561
    %v595 = vmax.f32 %v403, %v500
    %v596 = vmax.f32 %v405, %v502
    %v597 = vmax.f32 %v407, %v504
    %v598 = vmax.f32 %v409, %v506
    %v599 = vmax.f32 %v411, %v508
    %v600 = vmax.f32 %v413, %v510
    %v601 = vmax.f32 %v415, %v512
    %v602 = vmax.f32 %v417, %v514
    %v603 = vmax.f32 %v419, %v516
    %v604 = vmax.f32 %v421, %v518
    %v605 = vmax.f32 %v423, %v520
    %v606 = vmax.f32 %v425, %v522
    %v607 = vmax.f32 %v427, %v524
    %v608 = vmax.f32 %v429, %v526
    %v609 = vmax.f32 %v431, %v528
    %v610 = vmax.f32 %v433, %v530
    %v611 = vmax.f32 %v435, %v532
    %v612 = vmax.f32 %v437, %v534
    %v613 = vmax.f32 %v439, %v536
    %v614 = vmax.f32 %v441, %v538
    %v615 = vmax.f32 %v443, %v540
    %v616 = vmax.f32 %v445, %v542
    %v617 = vmax.f32 %v447, %v544
    %v618 = vmax.f32 %v449, %v546
    %v619 = vmax.f32 %v451, %v548
    %v620 = vmax.f32 %v453, %v550
    %v621 = vmax.f32 %v455, %v552
    %v622 = vmax.f32 %v457, %v554
    %v623 = vmax.f32 %v459, %v556
    %v624 = vmax.f32 %v461, %v558
    %v625 = vmax.f32 %v463, %v560
    %v626 = vmax.f32 %v465, %v562
    %659 = vrot.lane.b32.xlu0 %v404, 32
    %v660 = vpop.permute.xlu0 %659
    %661 = vrot.lane.b32.xlu0 %v406, 32
    %v662 = vpop.permute.xlu0 %661
    %663 = vrot.lane.b32.xlu0 %v408, 32
    %v664 = vpop.permute.xlu0 %663
    %665 = vrot.lane.b32.xlu0 %v410, 32
    %v666 = vpop.permute.xlu0 %665
    %667 = vrot.lane.b32.xlu0 %v412, 32
    %v668 = vpop.permute.xlu0 %667
    %669 = vrot.lane.b32.xlu0 %v414, 32
    %v670 = vpop.permute.xlu0 %669
    %671 = vrot.lane.b32.xlu0 %v416, 32
    %v672 = vpop.permute.xlu0 %671
    %673 = vrot.lane.b32.xlu0 %v418, 32
    %v674 = vpop.permute.xlu0 %673
    %675 = vrot.lane.b32.xlu0 %v420, 32
    %v676 = vpop.permute.xlu0 %675
    %677 = vrot.lane.b32.xlu0 %v422, 32
    %v678 = vpop.permute.xlu0 %677
    %679 = vrot.lane.b32.xlu0 %v424, 32
    %v680 = vpop.permute.xlu0 %679
    %681 = vrot.lane.b32.xlu0 %v426, 32
    %v682 = vpop.permute.xlu0 %681
    %683 = vrot.lane.b32.xlu0 %v428, 32
    %v684 = vpop.permute.xlu0 %683
    %685 = vrot.lane.b32.xlu0 %v430, 32
    %v686 = vpop.permute.xlu0 %685
    %687 = vrot.lane.b32.xlu0 %v432, 32
    %v688 = vpop.permute.xlu0 %687
    %689 = vrot.lane.b32.xlu0 %v434, 32
    %v690 = vpop.permute.xlu0 %689
    %691 = vrot.lane.b32.xlu0 %v436, 32
    %v692 = vpop.permute.xlu0 %691
    %693 = vrot.lane.b32.xlu0 %v438, 32
    %v694 = vpop.permute.xlu0 %693
    %695 = vrot.lane.b32.xlu0 %v440, 32
    %v696 = vpop.permute.xlu0 %695
    %697 = vrot.lane.b32.xlu0 %v442, 32
    %v698 = vpop.permute.xlu0 %697
    %699 = vrot.lane.b32.xlu0 %v444, 32
    %v700 = vpop.permute.xlu0 %699
    %701 = vrot.lane.b32.xlu0 %v446, 32
    %v702 = vpop.permute.xlu0 %701
    %703 = vrot.lane.b32.xlu0 %v448, 32
    %v704 = vpop.permute.xlu0 %703
    %705 = vrot.lane.b32.xlu0 %v450, 32
    %v706 = vpop.permute.xlu0 %705
    %707 = vrot.lane.b32.xlu0 %v452, 32
    %v708 = vpop.permute.xlu0 %707
    %709 = vrot.lane.b32.xlu0 %v454, 32
    %v710 = vpop.permute.xlu0 %709
    %711 = vrot.lane.b32.xlu0 %v456, 32
    %v712 = vpop.permute.xlu0 %711
    %713 = vrot.lane.b32.xlu0 %v458, 32
    %v714 = vpop.permute.xlu0 %713
    %715 = vrot.lane.b32.xlu0 %v460, 32
    %v716 = vpop.permute.xlu0 %715
    %717 = vrot.lane.b32.xlu0 %v462, 32
    %v718 = vpop.permute.xlu0 %717
    %719 = vrot.lane.b32.xlu0 %v464, 32
    %v720 = vpop.permute.xlu0 %719
    %721 = vrot.lane.b32.xlu0 %v466, 32
    %v722 = vpop.permute.xlu0 %721
    %v755 = vmax.f32 %v595, %v660
    %v756 = vmax.f32 %v596, %v662
    %v757 = vmax.f32 %v597, %v664
    %v758 = vmax.f32 %v598, %v666
    %v759 = vmax.f32 %v599, %v668
    %v760 = vmax.f32 %v600, %v670
    %v761 = vmax.f32 %v601, %v672
    %v762 = vmax.f32 %v602, %v674
    %v763 = vmax.f32 %v603, %v676
    %v764 = vmax.f32 %v604, %v678
    %v765 = vmax.f32 %v605, %v680
    %v766 = vmax.f32 %v606, %v682
    %v767 = vmax.f32 %v607, %v684
    %v768 = vmax.f32 %v608, %v686
    %v769 = vmax.f32 %v609, %v688
    %v770 = vmax.f32 %v610, %v690
    %v771 = vmax.f32 %v611, %v692
    %v772 = vmax.f32 %v612, %v694
    %v773 = vmax.f32 %v613, %v696
    %v774 = vmax.f32 %v614, %v698
    %v775 = vmax.f32 %v615, %v700
    %v776 = vmax.f32 %v616, %v702
    %v777 = vmax.f32 %v617, %v704
    %v778 = vmax.f32 %v618, %v706
    %v779 = vmax.f32 %v619, %v708
    %v780 = vmax.f32 %v620, %v710
    %v781 = vmax.f32 %v621, %v712
    %v782 = vmax.f32 %v622, %v714
    %v783 = vmax.f32 %v623, %v716
    %v784 = vmax.f32 %v624, %v718
    %v785 = vmax.f32 %v625, %v720
    %v786 = vmax.f32 %v626, %v722
    %vm787 = vcmask 261120
    %v788 = vsel %vm787, %v403, %v755
    %v789 = vsel %vm787, %v405, %v756
    %v790 = vsel %vm787, %v407, %v757
    %v791 = vsel %vm787, %v409, %v758
    %v792 = vsel %vm787, %v411, %v759
    %v793 = vsel %vm787, %v413, %v760
    %v794 = vsel %vm787, %v415, %v761
    %v795 = vsel %vm787, %v417, %v762
    %v796 = vsel %vm787, %v419, %v763
    %v797 = vsel %vm787, %v421, %v764
    %v798 = vsel %vm787, %v423, %v765
    %v799 = vsel %vm787, %v425, %v766
    %v800 = vsel %vm787, %v427, %v767
    %v801 = vsel %vm787, %v429, %v768
    %v802 = vsel %vm787, %v431, %v769
    %v803 = vsel %vm787, %v433, %v770
    %v804 = vsel %vm787, %v435, %v771
    %v805 = vsel %vm787, %v437, %v772
    %v806 = vsel %vm787, %v439, %v773
    %v807 = vsel %vm787, %v441, %v774
    %v808 = vsel %vm787, %v443, %v775
    %v809 = vsel %vm787, %v445, %v776
    %v810 = vsel %vm787, %v447, %v777
    %v811 = vsel %vm787, %v449, %v778
    %v812 = vsel %vm787, %v451, %v779
    %v813 = vsel %vm787, %v453, %v780
    %v814 = vsel %vm787, %v455, %v781
    %v815 = vsel %vm787, %v457, %v782
    %v816 = vsel %vm787, %v459, %v783
    %v817 = vsel %vm787, %v461, %v784
    %v818 = vsel %vm787, %v463, %v785
    %v819 = vsel %vm787, %v465, %v786
    %vm820 = vcmask 654336
    %v821 = vsel %vm820, %v788, 0.0
    %v822 = vsel %vm820, %v789, 0.0
    %v823 = vsel %vm820, %v790, 0.0
    %v824 = vsel %vm820, %v791, 0.0
    %v825 = vsel %vm820, %v792, 0.0
    %v826 = vsel %vm820, %v793, 0.0
    %v827 = vsel %vm820, %v794, 0.0
    %v828 = vsel %vm820, %v795, 0.0
    %v829 = vsel %vm820, %v796, 0.0
    %v830 = vsel %vm820, %v797, 0.0
    %v831 = vsel %vm820, %v798, 0.0
    %v832 = vsel %vm820, %v799, 0.0
    %v833 = vsel %vm820, %v800, 0.0
    %v834 = vsel %vm820, %v801, 0.0
    %v835 = vsel %vm820, %v802, 0.0
    %v836 = vsel %vm820, %v803, 0.0
    %v837 = vsel %vm820, %v804, 0.0
    %v838 = vsel %vm820, %v805, 0.0
    %v839 = vsel %vm820, %v806, 0.0
    %v840 = vsel %vm820, %v807, 0.0
    %v841 = vsel %vm820, %v808, 0.0
    %v842 = vsel %vm820, %v809, 0.0
    %v843 = vsel %vm820, %v810, 0.0
    %v844 = vsel %vm820, %v811, 0.0
    %v845 = vsel %vm820, %v812, 0.0
    %v846 = vsel %vm820, %v813, 0.0
    %v847 = vsel %vm820, %v814, 0.0
    %v848 = vsel %vm820, %v815, 0.0
    %v849 = vsel %vm820, %v816, 0.0
    %v850 = vsel %vm820, %v817, 0.0
    %v851 = vsel %vm820, %v818, 0.0
    %v852 = vsel %vm820, %v819, 0.0
    %853 = vst [vmem:[#allocation2] sm:$0xff] %v821
    %854 = vst [vmem:[#allocation2 + $0x8] sm:$0xff] %v822
    %855 = vst [vmem:[#allocation2 + $0x10] sm:$0xff] %v823
    %856 = vst [vmem:[#allocation2 + $0x18] sm:$0xff] %v824
    %857 = vst [vmem:[#allocation2 + $0x20] sm:$0xff] %v825
    %858 = vst [vmem:[#allocation2 + $0x28] sm:$0xff] %v826
    %859 = vst [vmem:[#allocation2 + $0x30] sm:$0xff] %v827
    %860 = vst [vmem:[#allocation2 + $0x38] sm:$0xff] %v828
    %861 = vst [vmem:[#allocation2 + $0x40] sm:$0xff] %v829
    %862 = vst [vmem:[#allocation2 + $0x48] sm:$0xff] %v830
    %863 = vst [vmem:[#allocation2 + $0x50] sm:$0xff] %v831
    %864 = vst [vmem:[#allocation2 + $0x58] sm:$0xff] %v832
    %865 = vst [vmem:[#allocation2 + $0x60] sm:$0xff] %v833
    %866 = vst [vmem:[#allocation2 + $0x68] sm:$0xff] %v834
    %867 = vst [vmem:[#allocation2 + $0x70] sm:$0xff] %v835
    %868 = vst [vmem:[#allocation2 + $0x78] sm:$0xff] %v836
    %869 = vst [vmem:[#allocation2 + $0x80] sm:$0xff] %v837
    %870 = vst [vmem:[#allocation2 + $0x88] sm:$0xff] %v838
    %871 = vst [vmem:[#allocation2 + $0x90] sm:$0xff] %v839
    %872 = vst [vmem:[#allocation2 + $0x98] sm:$0xff] %v840
    %873 = vst [vmem:[#allocation2 + $0xa0] sm:$0xff] %v841
    %874 = vst [vmem:[#allocation2 + $0xa8] sm:$0xff] %v842
    %875 = vst [vmem:[#allocation2 + $0xb0] sm:$0xff] %v843
    %876 = vst [vmem:[#allocation2 + $0xb8] sm:$0xff] %v844
    %877 = vst [vmem:[#allocation2 + $0xc0] sm:$0xff] %v845
    %878 = vst [vmem:[#allocation2 + $0xc8] sm:$0xff] %v846
    %879 = vst [vmem:[#allocation2 + $0xd0] sm:$0xff] %v847
    %880 = vst [vmem:[#allocation2 + $0xd8] sm:$0xff] %v848
    %881 = vst [vmem:[#allocation2 + $0xe0] sm:$0xff] %v849
    %882 = vst [vmem:[#allocation2 + $0xe8] sm:$0xff] %v850
    %883 = vst [vmem:[#allocation2 + $0xf0] sm:$0xff] %v851
    %884 = vst [vmem:[#allocation2 + $0xf8] sm:$0xff] %v852
    // Predicated region
    $region14: #{tpu_custom_call.1} parent=1 // pred_check
      _
    $region15: #{tpu_custom_call.1} parent=1 // pred_check_branch
      %886 = sbr.rel (0) target = $region17
    $region16: #{tpu_custom_call.1} parent=1 // pred_region
      %888 = vsyncadd [#allocation3], 0
      %s889 = sshll.u32 [#allocation2], 4
      %s890 = int_to_ptr.vmem [resolvable:$true] %s889
      %s891 = sshll.u32 %s3, 4
      %s892 = int_to_ptr.hbm [resolvable:$true] %s891
      %897 = dma.vmem_to_hbm [thread:$0]  %s890, 4096, %s892, [#allocation3], 128, 128, 8
    $region17: #{tpu_custom_call.1} parent=1 // pred_fallthru
      _
    // Predicated region
    $region18: #{tpu_custom_call.1} parent=1 // pred_check
      _
    $region19: #{tpu_custom_call.1} parent=1 // pred_check_branch
      %899 = sbr.rel (0) target = $region21
    $region20: #{tpu_custom_call.1} parent=1 // pred_region
      %901 = dma.done [#allocation3], 4096
    $region21: #{tpu_custom_call.1} parent=1 // pred_fallthru
      _
    %902 = vsyncpa [#allocation3], 1

</llo_original>
